<compile_context>
chip_gen: v5e
topology: v5e:2x2
jax: 0.10.0
libtpu: 0.0.40
codegen_flags: <defaults>
</compile_context>

<pallas_src>
import functools

import jax
import jax.numpy as jnp
from jax.experimental import pallas as pl
from jax.experimental.pallas import tpu as pltpu


OUT_LANES = 128  # lane-dense output slab width


def _round_up(n, m):
    return ((n + m - 1) // m) * m


def value_net_kernel(x_ref, w1_ref, b1_ref, w2_ref, b2_ref, w3_ref, o_ref):
    # x/w* arrive in bf16 (MXU-native); accumulate in f32; bias/ReLU in f32.
    x = x_ref[...]                                                   # (BM, S) bf16
    h1 = jnp.dot(x, w1_ref[...], preferred_element_type=jnp.float32)  # (BM, H) f32
    h1 = jnp.maximum(h1 + b1_ref[...], 0.0)
    h2 = jnp.dot(h1.astype(jnp.bfloat16), w2_ref[...],
                 preferred_element_type=jnp.float32)                  # (BM, H) f32
    h2 = jnp.maximum(h2 + b2_ref[...], 0.0)
    out = jnp.dot(h2.astype(jnp.bfloat16), w3_ref[...],
                  preferred_element_type=jnp.float32)                 # (BM, 128) f32
    o_ref[...] = out.astype(o_ref.dtype)                              # lane-dense store


@functools.partial(jax.jit, static_argnames=("block_batch",))
def value_network_forward(x, params, *, block_batch=256):
    """x: (B, S) float32. params: w1,b1,w2,b2,w3,b3 with weights laid out (in, out)."""
    x = jnp.asarray(x, jnp.float32)
    B, S = x.shape
    H = params["w1"].shape[1]

    # Batch tile: multiple of 8 sublanes, capped at block_batch (<= VMEM budget).
    BM = max(8, min(_round_up(block_batch, 8), _round_up(B, 8)))
    Bp = _round_up(B, BM)
    if Bp != B:
        x = jnp.pad(x, ((0, Bp - B), (0, 0)))

    # bf16 MXU operands (halves weight DMA bytes, full-rate MXU); f32 biases.
    x_bf = x.astype(jnp.bfloat16)
    w1 = params["w1"].astype(jnp.bfloat16)
    w2 = params["w2"].astype(jnp.bfloat16)
    # Zero-pad the (H, 1) head to (H, 128) so the output store is lane-dense.
    w3p = jnp.zeros((H, OUT_LANES), jnp.bfloat16).at[:, :1].set(
        params["w3"].astype(jnp.bfloat16))
    b1 = params["b1"].astype(jnp.float32).reshape(1, H)
    b2 = params["b2"].astype(jnp.float32).reshape(1, H)

    grid = (Bp // BM,)
    flops = 2 * Bp * (S * H + H * H + H * OUT_LANES)
    bytes_accessed = (x_bf.size * 2 + w1.size * 2 + w2.size * 2 + w3p.size * 2
                      + b1.size * 4 + b2.size * 4 + Bp * OUT_LANES * 4)

    out_pad = pl.pallas_call(
        value_net_kernel,
        out_shape=jax.ShapeDtypeStruct((Bp, OUT_LANES), jnp.float32),
        grid=grid,
        in_specs=[
            pl.BlockSpec((BM, S), lambda i: (i, 0)),          # x: tiled over batch
            pl.BlockSpec((S, H), lambda i: (0, 0)),           # w1: VMEM-resident
            pl.BlockSpec((1, H), lambda i: (0, 0)),           # b1
            pl.BlockSpec((H, H), lambda i: (0, 0)),           # w2
            pl.BlockSpec((1, H), lambda i: (0, 0)),           # b2
            pl.BlockSpec((H, OUT_LANES), lambda i: (0, 0)),   # w3 (zero-padded)
        ],
        out_specs=pl.BlockSpec((BM, OUT_LANES), lambda i: (i, 0)),
        compiler_params=pltpu.CompilerParams(
            dimension_semantics=("parallel",)),               # megacore on v7x
        cost_estimate=pl.CostEstimate(
            flops=flops, transcendentals=0, bytes_accessed=bytes_accessed),
    )(x_bf, w1, b1, w2, b2, w3p)

    # Slice the lane-dense slab back to (B, 1); scalar b3 added on the XLA side.
    return out_pad[:B, :1] + params["b3"].reshape(1, 1)


def init_params(key, state_size, hidden_size):
    """Deterministic init mimicking PyTorch Linear default U(-1/sqrt(fan_in), ...)."""
    ks = jax.random.split(key, 6)

    def linear(kw, kb, fan_in, fan_out):
        bound = 1.0 / jnp.sqrt(fan_in)
        w = jax.random.uniform(kw, (fan_in, fan_out), jnp.float32, -bound, bound)
        b = jax.random.uniform(kb, (1, fan_out), jnp.float32, -bound, bound)
        return w, b

    w1, b1 = linear(ks[0], ks[1], state_size, hidden_size)
    w2, b2 = linear(ks[2], ks[3], hidden_size, hidden_size)
    w3, b3 = linear(ks[4], ks[5], hidden_size, 1)
    return {"w1": w1, "b1": b1, "w2": w2, "b2": b2, "w3": w3, "b3": b3}


def reference_forward(x, p):
    """Mirrors the kernel's bf16-input / f32-accumulate numerics."""
    bf = jnp.bfloat16
    h1 = jnp.dot(x.astype(bf), p["w1"].astype(bf),
                 preferred_element_type=jnp.float32) + p["b1"]
    h1 = jnp.maximum(h1, 0.0)
    h2 = jnp.dot(h1.astype(bf), p["w2"].astype(bf),
                 preferred_element_type=jnp.float32) + p["b2"]
    h2 = jnp.maximum(h2, 0.0)
    return jnp.dot(h2.astype(bf), p["w3"].astype(bf),
                   preferred_element_type=jnp.float32) + p["b3"]


if __name__ == "__main__":
    key = jax.random.PRNGKey(0)
    k_param, k_x = jax.random.split(key)

    batch = 4
    state_size = 8
    hidden_size = 128   # module default; lane-aligned

    params = init_params(k_param, state_size, hidden_size)
    x = jax.random.normal(k_x, (batch, state_size), jnp.float32)

    out = value_network_forward(x, params)
    out = jax.block_until_ready(out)

    ref = reference_forward(x, params)
    assert out.shape == (batch, 1), out.shape
    assert jnp.allclose(out, ref, atol=2e-3, rtol=2e-3), (out, ref)

    print("KERNEL_OK")
</pallas_src>

<mosaic_0001>
module attributes {stable_mosaic.version = 11 : i64} {
  func.func @value_net_kernel(%arg0: i32, %arg1: memref<8x8xbf16, #tpu.memory_space<vmem>>, %arg2: memref<8x128xbf16, #tpu.memory_space<vmem>>, %arg3: memref<1x128xf32, #tpu.memory_space<vmem>>, %arg4: memref<128x128xbf16, #tpu.memory_space<vmem>>, %arg5: memref<1x128xf32, #tpu.memory_space<vmem>>, %arg6: memref<128x128xbf16, #tpu.memory_space<vmem>>, %arg7: memref<8x128xf32, #tpu.memory_space<vmem>>) attributes {dimension_semantics = [#tpu.dimension_semantics<parallel>], iteration_bounds = array<i64: 1>, scalar_prefetch = 0 : i64, scratch_operands = 0 : i64, tpu.core_type = #tpu.core_type<tc>, window_params = [{transform_indices = @transform_0, window_bounds = array<i64: 8, 8>}, {pipeline_mode = #tpu.pipeline_mode<synchronous>, transform_indices = @transform_1, window_bounds = array<i64: 8, 128>}, {pipeline_mode = #tpu.pipeline_mode<synchronous>, transform_indices = @transform_2, window_bounds = array<i64: 1, 128>}, {pipeline_mode = #tpu.pipeline_mode<synchronous>, transform_indices = @transform_3, window_bounds = array<i64: 128, 128>}, {pipeline_mode = #tpu.pipeline_mode<synchronous>, transform_indices = @transform_4, window_bounds = array<i64: 1, 128>}, {pipeline_mode = #tpu.pipeline_mode<synchronous>, transform_indices = @transform_5, window_bounds = array<i64: 128, 128>}, {transform_indices = @transform_6, window_bounds = array<i64: 8, 128>}]} {
    %c0 = arith.constant 0 : index
    %c0_0 = arith.constant 0 : index
    %0 = vector.load %arg1[%c0, %c0_0] : memref<8x8xbf16, #tpu.memory_space<vmem>>, vector<8x8xbf16>
    %c0_1 = arith.constant 0 : index
    %c0_2 = arith.constant 0 : index
    %1 = vector.load %arg2[%c0_1, %c0_2] : memref<8x128xbf16, #tpu.memory_space<vmem>>, vector<8x128xbf16>
    %cst = arith.constant dense<0.000000e+00> : vector<8x128xf32>
    %2 = tpu.matmul %0, %1, %cst {dimension_numbers = #tpu.dot_dimension_numbers<[1], [0], [0], [1], [0, 0, 1, 1], [], []>} : vector<8x8xbf16>, vector<8x128xbf16>, vector<8x128xf32> -> vector<8x128xf32>
    %c0_3 = arith.constant 0 : index
    %c0_4 = arith.constant 0 : index
    %3 = vector.load %arg3[%c0_3, %c0_4] : memref<1x128xf32, #tpu.memory_space<vmem>>, vector<1x128xf32>
    %4 = vector.broadcast %3 : vector<1x128xf32> to vector<8x128xf32>
    %5 = arith.addf %2, %4 : vector<8x128xf32>
    %cst_5 = arith.constant 0.000000e+00 : f32
    %6 = vector.broadcast %cst_5 : f32 to vector<8x128xf32>
    %7 = arith.maximumf %5, %6 : vector<8x128xf32>
    %8 = arith.truncf %7 : vector<8x128xf32> to vector<8x128xbf16>
    %c0_6 = arith.constant 0 : index
    %c0_7 = arith.constant 0 : index
    %9 = vector.load %arg4[%c0_6, %c0_7] : memref<128x128xbf16, #tpu.memory_space<vmem>>, vector<128x128xbf16>
    %cst_8 = arith.constant dense<0.000000e+00> : vector<8x128xf32>
    %10 = tpu.matmul %8, %9, %cst_8 {dimension_numbers = #tpu.dot_dimension_numbers<[1], [0], [0], [1], [0, 0, 1, 1], [], []>} : vector<8x128xbf16>, vector<128x128xbf16>, vector<8x128xf32> -> vector<8x128xf32>
    %c0_9 = arith.constant 0 : index
    %c0_10 = arith.constant 0 : index
    %11 = vector.load %arg5[%c0_9, %c0_10] : memref<1x128xf32, #tpu.memory_space<vmem>>, vector<1x128xf32>
    %12 = vector.broadcast %11 : vector<1x128xf32> to vector<8x128xf32>
    %13 = arith.addf %10, %12 : vector<8x128xf32>
    %cst_11 = arith.constant 0.000000e+00 : f32
    %14 = vector.broadcast %cst_11 : f32 to vector<8x128xf32>
    %15 = arith.maximumf %13, %14 : vector<8x128xf32>
    %16 = arith.truncf %15 : vector<8x128xf32> to vector<8x128xbf16>
    %c0_12 = arith.constant 0 : index
    %c0_13 = arith.constant 0 : index
    %17 = vector.load %arg6[%c0_12, %c0_13] : memref<128x128xbf16, #tpu.memory_space<vmem>>, vector<128x128xbf16>
    %cst_14 = arith.constant dense<0.000000e+00> : vector<8x128xf32>
    %18 = tpu.matmul %16, %17, %cst_14 {dimension_numbers = #tpu.dot_dimension_numbers<[1], [0], [0], [1], [0, 0, 1, 1], [], []>} : vector<8x128xbf16>, vector<128x128xbf16>, vector<8x128xf32> -> vector<8x128xf32>
    %c0_15 = arith.constant 0 : index
    %c0_16 = arith.constant 0 : index
    %19 = vector.load %arg7[%c0_15, %c0_16] : memref<8x128xf32, #tpu.memory_space<vmem>>, vector<8x128xf32>
    tpu.vector_store %arg7[%c0_15, %c0_16], %18 {strides = array<i32>} : memref<8x128xf32, #tpu.memory_space<vmem>>, vector<8x128xf32>,
    return
  }
  func.func @transform_0(%arg0: i32) -> (i32, i32) {
    %c0_i32 = arith.constant 0 : i32
    %c0_i32_0 = arith.constant 0 : i32
    return %arg0, %c0_i32 : i32, i32
  }
  func.func @transform_1(%arg0: i32) -> (i32, i32) {
    %c0_i32 = arith.constant 0 : i32
    %c0_i32_0 = arith.constant 0 : i32
    %c0_i32_1 = arith.constant 0 : i32
    return %c0_i32, %c0_i32_0 : i32, i32
  }
  func.func @transform_2(%arg0: i32) -> (i32, i32) {
    %c0_i32 = arith.constant 0 : i32
    %c0_i32_0 = arith.constant 0 : i32
    %c0_i32_1 = arith.constant 0 : i32
    return %c0_i32, %c0_i32_0 : i32, i32
  }
  func.func @transform_3(%arg0: i32) -> (i32, i32) {
    %c0_i32 = arith.constant 0 : i32
    %c0_i32_0 = arith.constant 0 : i32
    %c0_i32_1 = arith.constant 0 : i32
    return %c0_i32, %c0_i32_0 : i32, i32
  }
  func.func @transform_4(%arg0: i32) -> (i32, i32) {
    %c0_i32 = arith.constant 0 : i32
    %c0_i32_0 = arith.constant 0 : i32
    %c0_i32_1 = arith.constant 0 : i32
    return %c0_i32, %c0_i32_0 : i32, i32
  }
  func.func @transform_5(%arg0: i32) -> (i32, i32) {
    %c0_i32 = arith.constant 0 : i32
    %c0_i32_0 = arith.constant 0 : i32
    %c0_i32_1 = arith.constant 0 : i32
    return %c0_i32, %c0_i32_0 : i32, i32
  }
  func.func @transform_6(%arg0: i32) -> (i32, i32) {
    %c0_i32 = arith.constant 0 : i32
    %c0_i32_0 = arith.constant 0 : i32
    return %arg0, %c0_i32 : i32, i32
  }
}

</mosaic_0001>

<llo_original>
// kernel: value_network_forward.1
$region0: #{value_network_forward.1}
  #allocation0 [shape = 'u32[]', space=smem, size = 0x4, offset = 0x4, fixed_abs, tag = 'smem constant byte address 0x4 - core index']
  #allocation1 [shape = 'u32[72,128]{1,0:T(1,128)}', space=vmem, size = 0x9000, scoped, tag = 'internal scratch']
  %s0 = inlined_call_operand.vmem [shape: bf16[8,8], index: 0, kind: input, shape index: {}]
  %s1 = inlined_call_operand.vmem [shape: bf16[8,128], index: 1, kind: input, shape index: {}]
  %s2 = inlined_call_operand.vmem [shape: f32[1,128], index: 2, kind: input, shape index: {}]
  %s3 = inlined_call_operand.vmem [shape: bf16[128,128], index: 3, kind: input, shape index: {}]
  %s4 = inlined_call_operand.vmem [shape: f32[1,128], index: 4, kind: input, shape index: {}]
  %s5 = inlined_call_operand.vmem [shape: bf16[128,128], index: 5, kind: input, shape index: {}]
  %s6 = inlined_call_operand.vmem [shape: f32[8,128], index: 6, kind: output, shape index: {}]
  %s7 = sld [smem:[#allocation0]]
  $region34: #{value_network_forward.1} parent=0
    _
  %s9 = ssub.s32 1, %s7
  %s10 = scalar_select 0, %s9, %s7
  // Predicated region
  $region2: #{value_network_forward.1} parent=0 // pred_check
    _
  $region3: #{value_network_forward.1} parent=0 // pred_check_branch
    %12 = sbr.rel (0) target = $region5
  $region4: #{value_network_forward.1} parent=0 // pred_region
    _
  $region5: #{value_network_forward.1} parent=0 // pred_fallthru
    _
  // Predicated region
  $region6: #{value_network_forward.1} parent=0 // pred_check
    _
  $region7: #{value_network_forward.1} parent=0 // pred_check_branch
    %14 = sbr.rel (0) target = $region9
  $region8: #{value_network_forward.1} parent=0 // pred_region
    _
  $region9: #{value_network_forward.1} parent=0 // pred_fallthru
    _
  // Predicated region
  $region10: #{value_network_forward.1} parent=0 // pred_check
    _
  $region11: #{value_network_forward.1} parent=0 // pred_check_branch
    %16 = sbr.rel (0) target = $region13
  $region12: #{value_network_forward.1} parent=0 // pred_region
    _
  $region13: #{value_network_forward.1} parent=0 // pred_fallthru
    _
  // Predicated region
  $region14: #{value_network_forward.1} parent=0 // pred_check
    _
  $region15: #{value_network_forward.1} parent=0 // pred_check_branch
    %18 = sbr.rel (0) target = $region17
  $region16: #{value_network_forward.1} parent=0 // pred_region
    _
  $region17: #{value_network_forward.1} parent=0 // pred_fallthru
    _
  // Predicated region
  $region18: #{value_network_forward.1} parent=0 // pred_check
    _
  $region19: #{value_network_forward.1} parent=0 // pred_check_branch
    %20 = sbr.rel (0) target = $region21
  $region20: #{value_network_forward.1} parent=0 // pred_region
    _
  $region21: #{value_network_forward.1} parent=0 // pred_fallthru
    _
  // Predicated region
  $region22: #{value_network_forward.1} parent=0 // pred_check
    _
  $region23: #{value_network_forward.1} parent=0 // pred_check_branch
    %22 = sbr.rel (0) target = $region25
  $region24: #{value_network_forward.1} parent=0 // pred_region
    _
  $region25: #{value_network_forward.1} parent=0 // pred_fallthru
    _
  %v24 = vld [vmem:[%s0] sm:$0xf]
  %v25 = vld [vmem:[%s1] sm:$0xf]
  %v26 = vld [vmem:[%s2] sm:$0x1]
  %v28 = vperm.slane %v26, 0
  %vm30 = vcmask 64512
  %v32 = vsel %vm30, %v24, 0
  %vm34 = vcmask 1043456
  %v36 = vsel %vm34, %v25, 0
  %38 = vmatpush.bf16.msra.mxu0 0
  %39 = vmatpush.bf16.msra.mxu0 0
  %40 = vmatpush.bf16.msra.mxu0 0
  %41 = vmatpush.bf16.msra.mxu0 0
  %42 = vmatpush.bf16.msra.mxu0 0
  %43 = vmatpush.bf16.msra.mxu0 0
  %44 = vmatpush.bf16.msra.mxu0 0
  %45 = vmatpush.bf16.msra.mxu0 %v36
  %46 = vmatmul.bf16.gmra.mxu0 %v32
  %v47 = vpop.f32.mrf.mxu0
  %v48 = vadd.f32 %v28, %v47
  %v49 = vpop.f32.mrf.mxu0
  %50 = vdwg.mxu0
  %v51 = vmax.f32 %v48, 0.0
  %v52 = vpack.c.bf16 %v51, %v51
  %v53 = vld [vmem:[%s3] sm:$0xf]
  %v54 = vld [vmem:[%s3 + $0x4] sm:$0xf]
  %v55 = vld [vmem:[%s3 + $0x8] sm:$0xf]
  %v56 = vld [vmem:[%s3 + $0xc] sm:$0xf]
  %v57 = vld [vmem:[%s3 + $0x10] sm:$0xf]
  %v58 = vld [vmem:[%s3 + $0x14] sm:$0xf]
  %v59 = vld [vmem:[%s3 + $0x18] sm:$0xf]
  %v60 = vld [vmem:[%s3 + $0x1c] sm:$0xf]
  %v61 = vld [vmem:[%s3 + $0x20] sm:$0xf]
  %v62 = vld [vmem:[%s3 + $0x24] sm:$0xf]
  %v63 = vld [vmem:[%s3 + $0x28] sm:$0xf]
  %v64 = vld [vmem:[%s3 + $0x2c] sm:$0xf]
  %v65 = vld [vmem:[%s3 + $0x30] sm:$0xf]
  %v66 = vld [vmem:[%s3 + $0x34] sm:$0xf]
  %v67 = vld [vmem:[%s3 + $0x38] sm:$0xf]
  %v68 = vld [vmem:[%s3 + $0x3c] sm:$0xf]
  %v69 = vld [vmem:[%s4] sm:$0x1]
  %v71 = vperm.slane %v69, 0
  %v89 = vunpack.c.l.b16 %v53
  %v90 = vunpack.c.l.b16 %v54
  %v91 = vunpack.c.l.b16 %v55
  %v92 = vunpack.c.l.b16 %v56
  %v93 = vunpack.c.l.b16 %v57
  %v94 = vunpack.c.l.b16 %v58
  %v95 = vunpack.c.l.b16 %v59
  %v96 = vunpack.c.l.b16 %v60
  %v97 = vunpack.c.l.b16 %v61
  %v98 = vunpack.c.l.b16 %v62
  %v99 = vunpack.c.l.b16 %v63
  %v100 = vunpack.c.l.b16 %v64
  %v101 = vunpack.c.l.b16 %v65
  %v102 = vunpack.c.l.b16 %v66
  %v103 = vunpack.c.l.b16 %v67
  %v104 = vunpack.c.l.b16 %v68
  %v105 = vpack.c.b16 %v90, %v89
  %v106 = vpack.c.b16 %v92, %v91
  %v107 = vpack.c.b16 %v94, %v93
  %v108 = vpack.c.b16 %v96, %v95
  %v109 = vpack.c.b16 %v98, %v97
  %v110 = vpack.c.b16 %v100, %v99
  %v111 = vpack.c.b16 %v102, %v101
  %v112 = vpack.c.b16 %v104, %v103
  %121 = vmatpush.bf16.msra.mxu0 %v112
  %122 = vmatpush.bf16.msra.mxu0 %v111
  %123 = vmatpush.bf16.msra.mxu0 %v110
  %124 = vmatpush.bf16.msra.mxu0 %v109
  %125 = vmatpush.bf16.msra.mxu0 %v108
  %126 = vmatpush.bf16.msra.mxu0 %v107
  %127 = vmatpush.bf16.msra.mxu0 %v106
  %128 = vmatpush.bf16.msra.mxu0 %v105
  %129 = vmatmul.bf16.gmra.mxu0 %v52
  %v130 = vpop.f32.mrf.mxu0
  %v131 = vadd.f32 %v71, %v130
  %v132 = vpop.f32.mrf.mxu0
  %133 = vdwg.mxu0
  %v134 = vmax.f32 %v131, 0.0
  %v135 = vpack.c.bf16 %v134, %v134
  %v136 = vld [vmem:[%s5] sm:$0xf]
  %v137 = vld [vmem:[%s5 + $0x4] sm:$0xf]
  %v138 = vld [vmem:[%s5 + $0x8] sm:$0xf]
  %v139 = vld [vmem:[%s5 + $0xc] sm:$0xf]
  %v140 = vld [vmem:[%s5 + $0x10] sm:$0xf]
  %v141 = vld [vmem:[%s5 + $0x14] sm:$0xf]
  %v142 = vld [vmem:[%s5 + $0x18] sm:$0xf]
  %v143 = vld [vmem:[%s5 + $0x1c] sm:$0xf]
  %v144 = vld [vmem:[%s5 + $0x20] sm:$0xf]
  %v145 = vld [vmem:[%s5 + $0x24] sm:$0xf]
  %v146 = vld [vmem:[%s5 + $0x28] sm:$0xf]
  %v147 = vld [vmem:[%s5 + $0x2c] sm:$0xf]
  %v148 = vld [vmem:[%s5 + $0x30] sm:$0xf]
  %v149 = vld [vmem:[%s5 + $0x34] sm:$0xf]
  %v150 = vld [vmem:[%s5 + $0x38] sm:$0xf]
  %v151 = vld [vmem:[%s5 + $0x3c] sm:$0xf]
  %v168 = vunpack.c.l.b16 %v136
  %v169 = vunpack.c.l.b16 %v137
  %v170 = vunpack.c.l.b16 %v138
  %v171 = vunpack.c.l.b16 %v139
  %v172 = vunpack.c.l.b16 %v140
  %v173 = vunpack.c.l.b16 %v141
  %v174 = vunpack.c.l.b16 %v142
  %v175 = vunpack.c.l.b16 %v143
  %v176 = vunpack.c.l.b16 %v144
  %v177 = vunpack.c.l.b16 %v145
  %v178 = vunpack.c.l.b16 %v146
  %v179 = vunpack.c.l.b16 %v147
  %v180 = vunpack.c.l.b16 %v148
  %v181 = vunpack.c.l.b16 %v149
  %v182 = vunpack.c.l.b16 %v150
  %v183 = vunpack.c.l.b16 %v151
  %v184 = vpack.c.b16 %v169, %v168
  %v185 = vpack.c.b16 %v171, %v170
  %v186 = vpack.c.b16 %v173, %v172
  %v187 = vpack.c.b16 %v175, %v174
  %v188 = vpack.c.b16 %v177, %v176
  %v189 = vpack.c.b16 %v179, %v178
  %v190 = vpack.c.b16 %v181, %v180
  %v191 = vpack.c.b16 %v183, %v182
  %200 = vmatpush.bf16.msra.mxu0 %v191
  %201 = vmatpush.bf16.msra.mxu0 %v190
  %202 = vmatpush.bf16.msra.mxu0 %v189
  %203 = vmatpush.bf16.msra.mxu0 %v188
  %204 = vmatpush.bf16.msra.mxu0 %v187
  %205 = vmatpush.bf16.msra.mxu0 %v186
  %206 = vmatpush.bf16.msra.mxu0 %v185
  %207 = vmatpush.bf16.msra.mxu0 %v184
  %208 = vmatmul.bf16.gmra.mxu0 %v135
  %v209 = vpop.f32.mrf.mxu0
  %v210 = vadd.f32 0.0, %v209
  %v211 = vpop.f32.mrf.mxu0
  %212 = vdwg.mxu0
  %213 = vst [vmem:[%s6] sm:$0xff] %v210
  // Predicated region
  $region26: #{value_network_forward.1} parent=0 // pred_check
    _
  $region27: #{value_network_forward.1} parent=0 // pred_check_branch
    %215 = sbr.rel (0) target = $region29
  $region28: #{value_network_forward.1} parent=0 // pred_region
    _
  $region29: #{value_network_forward.1} parent=0 // pred_fallthru
    _
  // Predicated region
  $region30: #{value_network_forward.1} parent=0 // pred_check
    _
  $region31: #{value_network_forward.1} parent=0 // pred_check_branch
    %217 = sbr.rel (0) target = $region33
  $region32: #{value_network_forward.1} parent=0 // pred_region
    _
  $region33: #{value_network_forward.1} parent=0 // pred_fallthru
    _

</llo_original>
